<compile_context>
chip_gen: v6e
topology: v6e:2x2x1
jax: 0.10.0
libtpu: 0.0.40
codegen_flags: <defaults>
</compile_context>

<pallas_src>
import jax
import jax.numpy as jnp
from jax.experimental import pallas as pl
from jax.experimental.pallas import tpu as pltpu


def a_cse_kernel(x_ref, w0_ref, b0_ref, w1_ref, b1_ref, w2_ref, b2_ref, o_ref):
    Bt, C, L = x_ref.shape

    # conv0 taps: w0_ref is (3, C_out, C_in); tap k multiplies x[:, l + k - 1].
    w0l = w0_ref[0]          # applied to x[:, l-1]
    w0c = w0_ref[1]          # applied to x[:, l]
    w0r = w0_ref[2]          # applied to x[:, l+1]
    w1 = w1_ref[...]         # (C2, C)
    w2 = w2_ref[...]         # (C, C2)

    # Hoisted out of the per-row loop (JAX does not CSE broadcast_in_dim).
    b0 = jnp.broadcast_to(b0_ref[...], (C, L))
    zcol = jnp.zeros((C, 1), jnp.float32)
    inv_l = jnp.float32(1.0 / L)

    # ---- conv0 (+ folded BN0) + ReLU + global average pool, per batch row ----
    # Bt is a small compile-time tile (capped in the wrapper), so a static
    # Python loop keeps live ranges tiny.
    zs = []
    for b in range(Bt):
        x = x_ref[b].astype(jnp.float32)                         # (C, L)
        # k=3 / pad=1 taps via in-VMEM lane shifts with zero edge fill.
        xl = jnp.concatenate([zcol, x[:, : L - 1]], axis=1)      # x[:, l-1]
        xr = jnp.concatenate([x[:, 1:], zcol], axis=1)           # x[:, l+1]
        y = jnp.dot(w0c, x, preferred_element_type=jnp.float32)
        y = y + jnp.dot(w0l, xl, preferred_element_type=jnp.float32)
        y = y + jnp.dot(w0r, xr, preferred_element_type=jnp.float32)
        y = jnp.maximum(y + b0, 0.0)
        # squeeze: global average pool over L (lane reduce)
        zs.append(jnp.sum(y, axis=1, keepdims=True) * inv_l)     # (C, 1)

    # ---- excitation: run ONCE per grid step on the pooled (C, Bt) block ----
    z = jnp.concatenate(zs, axis=1) if Bt > 1 else zs[0]          # (C, Bt)
    h = jnp.maximum(
        jnp.dot(w1, z, preferred_element_type=jnp.float32) + b1_ref[...], 0.0)
    s = jax.nn.sigmoid(
        jnp.dot(w2, h, preferred_element_type=jnp.float32) + b2_ref[...])
    scale = 1.0 + s                                               # (C, Bt)

    # ---- residual scale: in_x * s + in_x == in_x * (1 + s), lane-dense store ----
    for b in range(Bt):
        o_ref[b] = (x_ref[b] * scale[:, b:b + 1]).astype(o_ref.dtype)


def _pick_batch_tile(B, C, L, itemsize, budget_bytes=24 << 20, max_unroll=16):
    """Batch rows per grid step.

    VMEM per row ~= in+out blocks double-buffered (4 * itemsize) plus ~4 f32
    in-kernel temporaries (x, xl, xr, y). A ~24 MiB budget keeps the whole
    call under v7x's 64 MiB VMEM (vmem_limit 48 MiB below) while moving
    multi-MiB blocks per step on v5e/v6e (near the HBM roofline knee).
    """
    per_row = C * L * (4 * itemsize + 4 * 4)
    bt = max(1, min(B, budget_bytes // per_row, max_unroll))
    if B >= 2:
        # Guarantee >= 2 grid steps so the "parallel" batch axis can be
        # split across v7x's two TensorCores (no effect on v5e/v6e).
        bt = min(bt, B // 2)
    return max(1, int(bt))


def a_cse_forward(x, params):
    B, C, L = x.shape
    C2 = params["w1"].shape[0]
    itemsize = jnp.dtype(x.dtype).itemsize
    bt = _pick_batch_tile(B, C, L, itemsize)

    # Pad (rather than shrink bt) for non-divisible batch sizes.
    n_steps = pl.cdiv(B, bt)
    Bp = n_steps * bt
    x_p = jnp.pad(x, ((0, Bp - B), (0, 0), (0, 0))) if Bp != B else x

    def full_spec(shape):
        nd = len(shape)
        return pl.BlockSpec(shape, lambda i, _nd=nd: (0,) * _nd)

    weight_bytes = 4 * (3 * C * C + 2 * C * C2 + 2 * C + C2)
    cost = pl.CostEstimate(
        flops=6 * Bp * C * C * L + 4 * Bp * C * C2 + 6 * Bp * C * L,
        transcendentals=Bp * C,
        bytes_accessed=2 * Bp * C * L * itemsize + n_steps * weight_bytes,
    )

    out = pl.pallas_call(
        a_cse_kernel,
        out_shape=jax.ShapeDtypeStruct((Bp, C, L), x.dtype),
        grid=(n_steps,),
        in_specs=[
            pl.BlockSpec((bt, C, L), lambda i: (i, 0, 0)),   # activations
            full_spec((3, C, C)),                            # w0 taps
            full_spec((C, 1)),                               # b0
            full_spec((C2, C)),                              # w1
            full_spec((C2, 1)),                              # b1
            full_spec((C, C2)),                              # w2
            full_spec((C, 1)),                               # b2
        ],
        out_specs=pl.BlockSpec((bt, C, L), lambda i: (i, 0, 0)),
        compiler_params=pltpu.CompilerParams(
            dimension_semantics=("parallel",),
            vmem_limit_bytes=48 * 1024 * 1024,
        ),
        cost_estimate=cost,
    )(x_p, params["w0"], params["b0"], params["w1"], params["b1"],
      params["w2"], params["b2"])

    return out[:B] if Bp != B else out


# ---------------- parameter construction (plain JAX glue) ----------------

def _fold_bn(w, b, gamma, beta, mean, var, eps=1e-5):
    # BN(conv(x)) == (scale*W) x + scale*(b - mean) + beta   (eval-mode BN)
    scale = gamma / jnp.sqrt(var + eps)
    w_f = w * scale[:, None, None]      # conv weights are (out, in, k)
    b_f = (b - mean) * scale + beta
    return w_f, b_f


def init_params(key, in_ch):
    c2 = in_ch // 2
    ks = jax.random.split(key, 18)

    def uni(k, shape, fan_in):
        bound = 1.0 / (fan_in ** 0.5)
        return jax.random.uniform(k, shape, jnp.float32, -bound, bound)

    # conv0: Conv1d(in_ch, in_ch, k=3)
    w0 = uni(ks[0], (in_ch, in_ch, 3), in_ch * 3)
    b0 = uni(ks[1], (in_ch,), in_ch * 3)
    g0 = 1.0 + 0.1 * jax.random.normal(ks[2], (in_ch,), jnp.float32)
    be0 = 0.1 * jax.random.normal(ks[3], (in_ch,), jnp.float32)
    m0 = 0.05 * jax.random.normal(ks[4], (in_ch,), jnp.float32)
    v0 = 1.0 + 0.1 * jnp.abs(jax.random.normal(ks[5], (in_ch,), jnp.float32))
    # conv1: Conv1d(in_ch, in_ch//2, k=1)
    w1 = uni(ks[6], (c2, in_ch, 1), in_ch)
    b1 = uni(ks[7], (c2,), in_ch)
    g1 = 1.0 + 0.1 * jax.random.normal(ks[8], (c2,), jnp.float32)
    be1 = 0.1 * jax.random.normal(ks[9], (c2,), jnp.float32)
    m1 = 0.05 * jax.random.normal(ks[10], (c2,), jnp.float32)
    v1 = 1.0 + 0.1 * jnp.abs(jax.random.normal(ks[11], (c2,), jnp.float32))
    # conv2: Conv1d(in_ch//2, in_ch, k=1)
    w2 = uni(ks[12], (in_ch, c2, 1), c2)
    b2 = uni(ks[13], (in_ch,), c2)
    g2 = 1.0 + 0.1 * jax.random.normal(ks[14], (in_ch,), jnp.float32)
    be2 = 0.1 * jax.random.normal(ks[15], (in_ch,), jnp.float32)
    m2 = 0.05 * jax.random.normal(ks[16], (in_ch,), jnp.float32)
    v2 = 1.0 + 0.1 * jnp.abs(jax.random.normal(ks[17], (in_ch,), jnp.float32))

    w0f, b0f = _fold_bn(w0, b0, g0, be0, m0, v0)
    w1f, b1f = _fold_bn(w1, b1, g1, be1, m1, v1)
    w2f, b2f = _fold_bn(w2, b2, g2, be2, m2, v2)

    # Stack the three k=3 taps along a leading axis: (3, C_out, C_in).
    w0stack = jnp.transpose(w0f, (2, 0, 1))

    return dict(
        w0=w0stack,                         # (3, C, C)
        b0=b0f[:, None],                    # (C, 1)
        w1=w1f[:, :, 0],                    # (C2, C)
        b1=b1f[:, None],                    # (C2, 1)
        w2=w2f[:, :, 0],                    # (C, C2)
        b2=b2f[:, None],                    # (C, 1)
    )


# ---------------- pure-JAX reference (for correctness check) ----------------

def ref_forward(x, p):
    B, C, L = x.shape
    xpad = jnp.pad(x, ((0, 0), (0, 0), (1, 1)))
    y = sum(jnp.einsum('oc,bcl->bol', p["w0"][k], xpad[:, :, k:k + L])
            for k in range(3))
    y = jax.nn.relu(y + p["b0"][None])                    # conv0 + BN0 + ReLU
    z = jnp.mean(y, axis=2, keepdims=True)                # AvgPool1d over L
    h = jax.nn.relu(jnp.einsum('oc,bcl->bol', p["w1"], z) + p["b1"][None])
    s = jax.nn.sigmoid(jnp.einsum('oc,bcl->bol', p["w2"], h) + p["b2"][None])
    return x * s + x


if __name__ == "__main__":
    key = jax.random.PRNGKey(0)

    for (B, C, L) in [(2, 8, 128), (4, 16, 256)]:
        kx, kp, key = jax.random.split(key, 3)
        x = jax.random.normal(kx, (B, C, L), jnp.float32)
        params = init_params(kp, C)

        out = a_cse_forward(x, params)
        out = jax.block_until_ready(out)

        ref = ref_forward(x, params)
        assert out.shape == (B, C, L), out.shape
        max_err = float(jnp.max(jnp.abs(out - ref)))
        assert jnp.allclose(out, ref, rtol=1e-3, atol=1e-3), max_err

    print("KERNEL_OK")
</pallas_src>

<mosaic_0001>
module attributes {stable_mosaic.version = 11 : i64} {
  func.func @a_cse_kernel(%arg0: i32, %arg1: memref<1x8x128xf32, #tpu.memory_space<vmem>>, %arg2: memref<3x8x8xf32, #tpu.memory_space<vmem>>, %arg3: memref<8x1xf32, #tpu.memory_space<vmem>>, %arg4: memref<4x8xf32, #tpu.memory_space<vmem>>, %arg5: memref<4x1xf32, #tpu.memory_space<vmem>>, %arg6: memref<8x4xf32, #tpu.memory_space<vmem>>, %arg7: memref<8x1xf32, #tpu.memory_space<vmem>>, %arg8: memref<1x8x128xf32, #tpu.memory_space<vmem>>) attributes {dimension_semantics = [#tpu.dimension_semantics<parallel>], iteration_bounds = array<i64: 2>, scalar_prefetch = 0 : i64, scratch_operands = 0 : i64, tpu.core_type = #tpu.core_type<tc>, window_params = [{transform_indices = @transform_0, window_bounds = array<i64: 1, 8, 128>}, {pipeline_mode = #tpu.pipeline_mode<synchronous>, transform_indices = @transform_1, window_bounds = array<i64: 3, 8, 8>}, {pipeline_mode = #tpu.pipeline_mode<synchronous>, transform_indices = @transform_2, window_bounds = array<i64: 8, 1>}, {pipeline_mode = #tpu.pipeline_mode<synchronous>, transform_indices = @transform_3, window_bounds = array<i64: 4, 8>}, {pipeline_mode = #tpu.pipeline_mode<synchronous>, transform_indices = @transform_4, window_bounds = array<i64: 4, 1>}, {pipeline_mode = #tpu.pipeline_mode<synchronous>, transform_indices = @transform_5, window_bounds = array<i64: 8, 4>}, {pipeline_mode = #tpu.pipeline_mode<synchronous>, transform_indices = @transform_6, window_bounds = array<i64: 8, 1>}, {transform_indices = @transform_7, window_bounds = array<i64: 1, 8, 128>}]} {
    %c0 = arith.constant 0 : index
    %c0_0 = arith.constant 0 : index
    %c0_1 = arith.constant 0 : index
    %0 = vector.load %arg2[%c0, %c0_0, %c0_1] : memref<3x8x8xf32, #tpu.memory_space<vmem>>, vector<1x8x8xf32>
    %1 = vector.shape_cast %0 : vector<1x8x8xf32> to vector<8x8xf32>
    %c1 = arith.constant 1 : index
    %c0_2 = arith.constant 0 : index
    %c0_3 = arith.constant 0 : index
    %2 = vector.load %arg2[%c1, %c0_2, %c0_3] : memref<3x8x8xf32, #tpu.memory_space<vmem>>, vector<1x8x8xf32>
    %3 = vector.shape_cast %2 : vector<1x8x8xf32> to vector<8x8xf32>
    %c2 = arith.constant 2 : index
    %c0_4 = arith.constant 0 : index
    %c0_5 = arith.constant 0 : index
    %4 = vector.load %arg2[%c2, %c0_4, %c0_5] : memref<3x8x8xf32, #tpu.memory_space<vmem>>, vector<1x8x8xf32>
    %5 = vector.shape_cast %4 : vector<1x8x8xf32> to vector<8x8xf32>
    %c0_6 = arith.constant 0 : index
    %c0_7 = arith.constant 0 : index
    %6 = vector.load %arg4[%c0_6, %c0_7] : memref<4x8xf32, #tpu.memory_space<vmem>>, vector<4x8xf32>
    %c0_8 = arith.constant 0 : index
    %c0_9 = arith.constant 0 : index
    %7 = vector.load %arg6[%c0_8, %c0_9] : memref<8x4xf32, #tpu.memory_space<vmem>>, vector<8x4xf32>
    %c0_10 = arith.constant 0 : index
    %c0_11 = arith.constant 0 : index
    %8 = vector.load %arg3[%c0_10, %c0_11] : memref<8x1xf32, #tpu.memory_space<vmem>>, vector<8x1xf32>
    %9 = vector.shape_cast %8 : vector<8x1xf32> to vector<8x1xf32>
    %10 = vector.broadcast %9 : vector<8x1xf32> to vector<8x128xf32>
    %cst = arith.constant 0.000000e+00 : f32
    %11 = vector.broadcast %cst : f32 to vector<8x1xf32>
    %c0_12 = arith.constant 0 : index
    %c0_13 = arith.constant 0 : index
    %c0_14 = arith.constant 0 : index
    %12 = vector.load %arg1[%c0_12, %c0_13, %c0_14] : memref<1x8x128xf32, #tpu.memory_space<vmem>>, vector<1x8x128xf32>
    %13 = vector.shape_cast %12 : vector<1x8x128xf32> to vector<8x128xf32>
    %14 = vector.extract_strided_slice %13 {offsets = [0, 0], sizes = [8, 127], strides = [1, 1]} : vector<8x128xf32> to vector<8x127xf32>
    %15 = tpu.concatenate %11, %14 in 1 : vector<8x1xf32>, vector<8x127xf32> -> vector<8x128xf32>
    %16 = vector.extract_strided_slice %13 {offsets = [0, 1], sizes = [8, 127], strides = [1, 1]} : vector<8x128xf32> to vector<8x127xf32>
    %17 = tpu.concatenate %16, %11 in 1 : vector<8x127xf32>, vector<8x1xf32> -> vector<8x128xf32>
    %cst_15 = arith.constant dense<0.000000e+00> : vector<8x128xf32>
    %18 = tpu.matmul %3, %13, %cst_15 {dimension_numbers = #tpu.dot_dimension_numbers<[1], [0], [0], [1], [0, 0, 1, 1], [], []>} : vector<8x8xf32>, vector<8x128xf32>, vector<8x128xf32> -> vector<8x128xf32>
    %cst_16 = arith.constant dense<0.000000e+00> : vector<8x128xf32>
    %19 = tpu.matmul %1, %15, %cst_16 {dimension_numbers = #tpu.dot_dimension_numbers<[1], [0], [0], [1], [0, 0, 1, 1], [], []>} : vector<8x8xf32>, vector<8x128xf32>, vector<8x128xf32> -> vector<8x128xf32>
    %20 = arith.addf %18, %19 : vector<8x128xf32>
    %cst_17 = arith.constant dense<0.000000e+00> : vector<8x128xf32>
    %21 = tpu.matmul %5, %17, %cst_17 {dimension_numbers = #tpu.dot_dimension_numbers<[1], [0], [0], [1], [0, 0, 1, 1], [], []>} : vector<8x8xf32>, vector<8x128xf32>, vector<8x128xf32> -> vector<8x128xf32>
    %22 = arith.addf %20, %21 : vector<8x128xf32>
    %23 = arith.addf %22, %10 : vector<8x128xf32>
    %cst_18 = arith.constant 0.000000e+00 : f32
    %24 = vector.broadcast %cst_18 : f32 to vector<8x128xf32>
    %25 = arith.maximumf %23, %24 : vector<8x128xf32>
    %cst_19 = arith.constant dense<0.000000e+00> : vector<8xf32>
    %26 = vector.multi_reduction <add>, %25, %cst_19 [1] : vector<8x128xf32> to vector<8xf32>
    %27 = vector.shape_cast %26 : vector<8xf32> to vector<8x1xf32>
    %cst_20 = arith.constant 7.812500e-03 : f32
    %28 = vector.broadcast %cst_20 : f32 to vector<8x1xf32>
    %29 = arith.mulf %27, %28 : vector<8x1xf32>
    %cst_21 = arith.constant dense<0.000000e+00> : vector<4x1xf32>
    %30 = tpu.matmul %6, %29, %cst_21 {dimension_numbers = #tpu.dot_dimension_numbers<[1], [0], [0], [1], [0, 0, 1, 1], [], []>} : vector<4x8xf32>, vector<8x1xf32>, vector<4x1xf32> -> vector<4x1xf32>
    %c0_22 = arith.constant 0 : index
    %c0_23 = arith.constant 0 : index
    %31 = vector.load %arg5[%c0_22, %c0_23] : memref<4x1xf32, #tpu.memory_space<vmem>>, vector<4x1xf32>
    %32 = arith.addf %30, %31 : vector<4x1xf32>
    %cst_24 = arith.constant 0.000000e+00 : f32
    %33 = vector.broadcast %cst_24 : f32 to vector<4x1xf32>
    %34 = arith.maximumf %32, %33 : vector<4x1xf32>
    %cst_25 = arith.constant dense<0.000000e+00> : vector<8x1xf32>
    %35 = tpu.matmul %7, %34, %cst_25 {dimension_numbers = #tpu.dot_dimension_numbers<[1], [0], [0], [1], [0, 0, 1, 1], [], []>} : vector<8x4xf32>, vector<4x1xf32>, vector<8x1xf32> -> vector<8x1xf32>
    %c0_26 = arith.constant 0 : index
    %c0_27 = arith.constant 0 : index
    %36 = vector.load %arg7[%c0_26, %c0_27] : memref<8x1xf32, #tpu.memory_space<vmem>>, vector<8x1xf32>
    %37 = arith.addf %35, %36 : vector<8x1xf32>
    %38 = arith.negf %37 : vector<8x1xf32>
    %39 = math.exp %38 : vector<8x1xf32>
    %cst_28 = arith.constant 1.000000e+00 : f32
    %40 = vector.broadcast %cst_28 : f32 to vector<8x1xf32>
    %41 = arith.addf %40, %39 : vector<8x1xf32>
    %42 = arith.divf %40, %41 : vector<8x1xf32>
    %cst_29 = arith.constant 1.000000e+00 : f32
    %43 = vector.broadcast %cst_29 : f32 to vector<8x1xf32>
    %44 = arith.addf %43, %42 : vector<8x1xf32>
    %c0_30 = arith.constant 0 : index
    %c0_31 = arith.constant 0 : index
    %c0_32 = arith.constant 0 : index
    %45 = vector.load %arg1[%c0_30, %c0_31, %c0_32] : memref<1x8x128xf32, #tpu.memory_space<vmem>>, vector<1x8x128xf32>
    %46 = vector.shape_cast %45 : vector<1x8x128xf32> to vector<8x128xf32>
    %47 = vector.broadcast %44 : vector<8x1xf32> to vector<8x128xf32>
    %48 = arith.mulf %46, %47 : vector<8x128xf32>
    %c0_33 = arith.constant 0 : index
    %c0_34 = arith.constant 0 : index
    %c0_35 = arith.constant 0 : index
    %49 = vector.load %arg8[%c0_33, %c0_34, %c0_35] : memref<1x8x128xf32, #tpu.memory_space<vmem>>, vector<1x8x128xf32>
    %50 = vector.shape_cast %49 : vector<1x8x128xf32> to vector<8x128xf32>
    %51 = vector.shape_cast %48 : vector<8x128xf32> to vector<1x8x128xf32>
    tpu.vector_store %arg8[%c0_33, %c0_34, %c0_35], %51 {strides = array<i32>} : memref<1x8x128xf32, #tpu.memory_space<vmem>>, vector<1x8x128xf32>,
    return
  }
  func.func @transform_0(%arg0: i32) -> (i32, i32, i32) {
    %c0_i32 = arith.constant 0 : i32
    %c0_i32_0 = arith.constant 0 : i32
    %c0_i32_1 = arith.constant 0 : i32
    return %arg0, %c0_i32, %c0_i32_0 : i32, i32, i32
  }
  func.func @transform_1(%arg0: i32) -> (i32, i32, i32) {
    %c0_i32 = arith.constant 0 : i32
    %c0_i32_0 = arith.constant 0 : i32
    %c0_i32_1 = arith.constant 0 : i32
    %c0_i32_2 = arith.constant 0 : i32
    return %c0_i32, %c0_i32_0, %c0_i32_1 : i32, i32, i32
  }
  func.func @transform_2(%arg0: i32) -> (i32, i32) {
    %c0_i32 = arith.constant 0 : i32
    %c0_i32_0 = arith.constant 0 : i32
    %c0_i32_1 = arith.constant 0 : i32
    return %c0_i32, %c0_i32_0 : i32, i32
  }
  func.func @transform_3(%arg0: i32) -> (i32, i32) {
    %c0_i32 = arith.constant 0 : i32
    %c0_i32_0 = arith.constant 0 : i32
    %c0_i32_1 = arith.constant 0 : i32
    return %c0_i32, %c0_i32_0 : i32, i32
  }
  func.func @transform_4(%arg0: i32) -> (i32, i32) {
    %c0_i32 = arith.constant 0 : i32
    %c0_i32_0 = arith.constant 0 : i32
    %c0_i32_1 = arith.constant 0 : i32
    return %c0_i32, %c0_i32_0 : i32, i32
  }
  func.func @transform_5(%arg0: i32) -> (i32, i32) {
    %c0_i32 = arith.constant 0 : i32
    %c0_i32_0 = arith.constant 0 : i32
    %c0_i32_1 = arith.constant 0 : i32
    return %c0_i32, %c0_i32_0 : i32, i32
  }
  func.func @transform_6(%arg0: i32) -> (i32, i32) {
    %c0_i32 = arith.constant 0 : i32
    %c0_i32_0 = arith.constant 0 : i32
    %c0_i32_1 = arith.constant 0 : i32
    return %c0_i32, %c0_i32_0 : i32, i32
  }
  func.func @transform_7(%arg0: i32) -> (i32, i32, i32) {
    %c0_i32 = arith.constant 0 : i32
    %c0_i32_0 = arith.constant 0 : i32
    %c0_i32_1 = arith.constant 0 : i32
    return %arg0, %c0_i32, %c0_i32_0 : i32, i32, i32
  }
}

</mosaic_0001>

<llo_original>
// kernel: tpu_custom_call.1
$region0: #{tpu_custom_call.1}
  #allocation0 [shape = 'u32[]', space=smem, size = 0x4, offset = 0x4, fixed_abs, tag = 'smem constant byte address 0x4 - core index']
  #allocation1 [shape = 'u32[144,128]{1,0:T(1,128)}', space=vmem, size = 0x12000, scoped, tag = 'internal scratch']
  %s0 = inlined_call_operand.hbm [shape: f32[2,8,128], index: 0, kind: input, shape index: {}]
  %s1 = inlined_call_operand.vmem [shape: f32[3,8,8], index: 1, kind: input, shape index: {}]
  %s2 = inlined_call_operand.vmem [shape: f32[8,1], index: 2, kind: input, shape index: {}]
  %s3 = inlined_call_operand.vmem [shape: f32[4,8], index: 3, kind: input, shape index: {}]
  %s4 = inlined_call_operand.vmem [shape: f32[4,1], index: 4, kind: input, shape index: {}]
  %s5 = inlined_call_operand.vmem [shape: f32[8,4], index: 5, kind: input, shape index: {}]
  %s6 = inlined_call_operand.vmem [shape: f32[8,1], index: 6, kind: input, shape index: {}]
  %s7 = inlined_call_operand.hbm [shape: f32[2,8,128], index: 7, kind: output, shape index: {}]
  %s8 = sld [smem:[#allocation0]]
  $region65: #{tpu_custom_call.1} parent=0
    _
  %s10 = ssub.s32 1, %s8
  %s11 = scalar_select 0, %s10, %s8
  $region1: #{tpu_custom_call.1} parent=0
    #allocation2 [shape = 'u8[8192]{0}', space=vmem, size = 0x2000, scoped, tag = 'input window, operand 0']
    #allocation3 [shape = 's32[2]{0}', space=sflag, size = 0x8, scoped, tag = 'scoped memory for tpu_custom_call.1']
    #allocation4 [shape = 's32[2]{0}', space=sflag, size = 0x8, scoped, tag = 'scoped memory for tpu_custom_call.1']
    #allocation5 [shape = 'u8[8192]{0}', space=vmem, size = 0x2000, scoped, tag = 'output window, operand 0']
    %12 = vsyncpa [#allocation3], 0
    %s13 = scalar_lea.sflag [#allocation3], 1
    %14 = vsyncpa %s13, 0
    %15 = vsyncpa [#allocation4], 0
    %s16 = scalar_lea.sflag [#allocation4], 1
    %17 = vsyncpa %s16, 0
    loop: start=0, step=1, limit=4
    $region2: #{tpu_custom_call.1} parent=1 // loop_pre_header
      _
    $region3: #{tpu_custom_call.1} parent=1 // loop_header
      %s19 = sphi 0, %s23
      %p20 = scmp.ge.s32.totalorder %s19, 4
      %s29 = sphi 0, %s31
      %s32 = sphi 0, %s29
      %s33 = sphi 0, %s32
      %s49 = sphi 0, %s33
      %s53 = sphi 0, %s53
      %s55 = sphi 0, %s53
      %s56 = sphi 0, %s55
      %s70 = sphi 0, %s56
      %s74 = sphi 0, %s74
      %s76 = sphi 0, %s74
      %s77 = sphi 0, %s76
      %s91 = sphi 0, %s77
      %s95 = sphi 0, %s95
      %s97 = sphi 0, %s95
      %s98 = sphi 0, %s97
      %s112 = sphi 0, %s98
      %s116 = sphi 0, %s116
      %s118 = sphi 0, %s116
      %s119 = sphi 0, %s118
      %s133 = sphi 0, %s119
      %s137 = sphi 0, %s137
      %s139 = sphi 0, %s137
      %s140 = sphi 0, %s139
      %s154 = sphi 0, %s140
      %s158 = sphi 0, %s158
      %s160 = sphi 0, %s158
      %s161 = sphi 0, %s160
      %s175 = sphi 0, %s161
      %s181 = sphi 0, %s183
      %s184 = sphi 0, %s181
      %s185 = sphi 0, %s184
      %s201 = sphi 0, %s185
    $region4: #{tpu_custom_call.1} parent=1 // loop_header_branch
      %22 = sbr.rel (%p20) target = $region8
    $region5: #{tpu_custom_call.1} parent=1 // loop_body
      %s24 = ssub.s32 %s19, 1
      %s25 = ssub.s32 %s19, 2
      %s26 = sadd.s32 %s19, 1
      %s27 = ssub.s32 %s19, %s26
      %p28 = scmp.eq.s32.totalorder %s27, 0
      %s30 = sadd.s32 %s29, 1
      %s31 = scalar_select %p28, %s29, %s30
      %p34 = pneg %p28
      %p35 = scmp.eq.s32.totalorder %s19, 1
      %p36 = por %p34, %p35
      %p37 = scmp.ne.s32.totalorder %s29, %s32
      %p38 = scmp.eq.s32.totalorder %s19, 0
      %p39 = por %p37, %p38
      %p40 = scmp.ne.s32.totalorder %s29, %s32
      %p41 = scmp.eq.s32.totalorder %s24, 1
      %p42 = por %p40, %p41
      %p43 = scmp.ne.s32.totalorder %s32, %s33
      %p44 = scmp.eq.s32.totalorder %s24, 0
      %p45 = por %p43, %p44
      %p46 = scmp.ne.s32.totalorder %s32, %s33
      %p47 = scmp.eq.s32.totalorder %s25, 1
      %p48 = por %p46, %p47
      %p50 = scmp.ne.s32.totalorder %s33, %s49
      %p51 = scmp.eq.s32.totalorder %s25, 0
      %p52 = por %p50, %p51
      %s54 = sadd.s32 %s53, 1
      %p57 = scmp.eq.s32.totalorder %s19, 1
      %p58 = scmp.ne.s32.totalorder %s53, %s55
      %p59 = scmp.eq.s32.totalorder %s19, 0
      %p60 = por %p58, %p59
      %p61 = scmp.ne.s32.totalorder %s53, %s55
      %p62 = scmp.eq.s32.totalorder %s24, 1
      %p63 = por %p61, %p62
      %p64 = scmp.ne.s32.totalorder %s55, %s56
      %p65 = scmp.eq.s32.totalorder %s24, 0
      %p66 = por %p64, %p65
      %p67 = scmp.ne.s32.totalorder %s55, %s56
      %p68 = scmp.eq.s32.totalorder %s25, 1
      %p69 = por %p67, %p68
      %p71 = scmp.ne.s32.totalorder %s56, %s70
      %p72 = scmp.eq.s32.totalorder %s25, 0
      %p73 = por %p71, %p72
      %s75 = sadd.s32 %s74, 1
      %p78 = scmp.eq.s32.totalorder %s19, 1
      %p79 = scmp.ne.s32.totalorder %s74, %s76
      %p80 = scmp.eq.s32.totalorder %s19, 0
      %p81 = por %p79, %p80
      %p82 = scmp.ne.s32.totalorder %s74, %s76
      %p83 = scmp.eq.s32.totalorder %s24, 1
      %p84 = por %p82, %p83
      %p85 = scmp.ne.s32.totalorder %s76, %s77
      %p86 = scmp.eq.s32.totalorder %s24, 0
      %p87 = por %p85, %p86
      %p88 = scmp.ne.s32.totalorder %s76, %s77
      %p89 = scmp.eq.s32.totalorder %s25, 1
      %p90 = por %p88, %p89
      %p92 = scmp.ne.s32.totalorder %s77, %s91
      %p93 = scmp.eq.s32.totalorder %s25, 0
      %p94 = por %p92, %p93
      %s96 = sadd.s32 %s95, 1
      %p99 = scmp.eq.s32.totalorder %s19, 1
      %p100 = scmp.ne.s32.totalorder %s95, %s97
      %p101 = scmp.eq.s32.totalorder %s19, 0
      %p102 = por %p100, %p101
      %p103 = scmp.ne.s32.totalorder %s95, %s97
      %p104 = scmp.eq.s32.totalorder %s24, 1
      %p105 = por %p103, %p104
      %p106 = scmp.ne.s32.totalorder %s97, %s98
      %p107 = scmp.eq.s32.totalorder %s24, 0
      %p108 = por %p106, %p107
      %p109 = scmp.ne.s32.totalorder %s97, %s98
      %p110 = scmp.eq.s32.totalorder %s25, 1
      %p111 = por %p109, %p110
      %p113 = scmp.ne.s32.totalorder %s98, %s112
      %p114 = scmp.eq.s32.totalorder %s25, 0
      %p115 = por %p113, %p114
      %s117 = sadd.s32 %s116, 1
      %p120 = scmp.eq.s32.totalorder %s19, 1
      %p121 = scmp.ne.s32.totalorder %s116, %s118
      %p122 = scmp.eq.s32.totalorder %s19, 0
      %p123 = por %p121, %p122
      %p124 = scmp.ne.s32.totalorder %s116, %s118
      %p125 = scmp.eq.s32.totalorder %s24, 1
      %p126 = por %p124, %p125
      %p127 = scmp.ne.s32.totalorder %s118, %s119
      %p128 = scmp.eq.s32.totalorder %s24, 0
      %p129 = por %p127, %p128
      %p130 = scmp.ne.s32.totalorder %s118, %s119
      %p131 = scmp.eq.s32.totalorder %s25, 1
      %p132 = por %p130, %p131
      %p134 = scmp.ne.s32.totalorder %s119, %s133
      %p135 = scmp.eq.s32.totalorder %s25, 0
      %p136 = por %p134, %p135
      %s138 = sadd.s32 %s137, 1
      %p141 = scmp.eq.s32.totalorder %s19, 1
      %p142 = scmp.ne.s32.totalorder %s137, %s139
      %p143 = scmp.eq.s32.totalorder %s19, 0
      %p144 = por %p142, %p143
      %p145 = scmp.ne.s32.totalorder %s137, %s139
      %p146 = scmp.eq.s32.totalorder %s24, 1
      %p147 = por %p145, %p146
      %p148 = scmp.ne.s32.totalorder %s139, %s140
      %p149 = scmp.eq.s32.totalorder %s24, 0
      %p150 = por %p148, %p149
      %p151 = scmp.ne.s32.totalorder %s139, %s140
      %p152 = scmp.eq.s32.totalorder %s25, 1
      %p153 = por %p151, %p152
      %p155 = scmp.ne.s32.totalorder %s140, %s154
      %p156 = scmp.eq.s32.totalorder %s25, 0
      %p157 = por %p155, %p156
      %s159 = sadd.s32 %s158, 1
      %p162 = scmp.eq.s32.totalorder %s19, 1
      %p163 = scmp.ne.s32.totalorder %s158, %s160
      %p164 = scmp.eq.s32.totalorder %s19, 0
      %p165 = por %p163, %p164
      %p166 = scmp.ne.s32.totalorder %s158, %s160
      %p167 = scmp.eq.s32.totalorder %s24, 1
      %p168 = por %p166, %p167
      %p169 = scmp.ne.s32.totalorder %s160, %s161
      %p170 = scmp.eq.s32.totalorder %s24, 0
      %p171 = por %p169, %p170
      %p172 = scmp.ne.s32.totalorder %s160, %s161
      %p173 = scmp.eq.s32.totalorder %s25, 1
      %p174 = por %p172, %p173
      %p176 = scmp.ne.s32.totalorder %s161, %s175
      %p177 = scmp.eq.s32.totalorder %s25, 0
      %p178 = por %p176, %p177
      %s179 = ssub.s32 %s19, %s26
      %p180 = scmp.eq.s32.totalorder %s179, 0
      %s182 = sadd.s32 %s181, 1
      %s183 = scalar_select %p180, %s181, %s182
      %p186 = pneg %p180
      %p187 = scmp.eq.s32.totalorder %s19, 1
      %p188 = por %p186, %p187
      %p189 = scmp.ne.s32.totalorder %s181, %s184
      %p190 = scmp.eq.s32.totalorder %s19, 0
      %p191 = por %p189, %p190
      %p192 = scmp.ne.s32.totalorder %s181, %s184
      %p193 = scmp.eq.s32.totalorder %s24, 1
      %p194 = por %p192, %p193
      %p195 = scmp.ne.s32.totalorder %s184, %s185
      %p196 = scmp.eq.s32.totalorder %s24, 0
      %p197 = por %p195, %p196
      %p198 = scmp.ne.s32.totalorder %s184, %s185
      %p199 = scmp.eq.s32.totalorder %s25, 1
      %p200 = por %p198, %p199
      %p202 = scmp.ne.s32.totalorder %s185, %s201
      %p203 = scmp.eq.s32.totalorder %s25, 0
      %p204 = por %p202, %p203
      %p205 = scmp.le.s32.totalorder 1, %s19
      %p206 = scmp.lt.s32.totalorder %s19, 3
      %p207 = pnand %p205, %p206
      %p208 = pneg %p207
      // Predicated region
      $region9: #{tpu_custom_call.1} parent=5 // pred_check
        _
      $region10: #{tpu_custom_call.1} parent=5 // pred_check_branch
        %210 = sbr.rel (%p207) target = $region12
      $region11: #{tpu_custom_call.1} parent=5 // pred_region
        %s211 = ssub.s32 %s19, 1
        // Predicated region
        $region13: #{tpu_custom_call.1} parent=11 // pred_check
          %p212 = pneg %p66
        $region14: #{tpu_custom_call.1} parent=11 // pred_check_branch
          %214 = sbr.rel (%p212) target = $region16
        $region15: #{tpu_custom_call.1} parent=11 // pred_region
          _
        $region16: #{tpu_custom_call.1} parent=11 // pred_fallthru
          _
        // Predicated region
        $region17: #{tpu_custom_call.1} parent=11 // pred_check
          %p215 = pneg %p87
        $region18: #{tpu_custom_call.1} parent=11 // pred_check_branch
          %217 = sbr.rel (%p215) target = $region20
        $region19: #{tpu_custom_call.1} parent=11 // pred_region
          _
        $region20: #{tpu_custom_call.1} parent=11 // pred_fallthru
          _
        // Predicated region
        $region21: #{tpu_custom_call.1} parent=11 // pred_check
          %p218 = pneg %p108
        $region22: #{tpu_custom_call.1} parent=11 // pred_check_branch
          %220 = sbr.rel (%p218) target = $region24
        $region23: #{tpu_custom_call.1} parent=11 // pred_region
          _
        $region24: #{tpu_custom_call.1} parent=11 // pred_fallthru
          _
        // Predicated region
        $region25: #{tpu_custom_call.1} parent=11 // pred_check
          %p221 = pneg %p129
        $region26: #{tpu_custom_call.1} parent=11 // pred_check_branch
          %223 = sbr.rel (%p221) target = $region28
        $region27: #{tpu_custom_call.1} parent=11 // pred_region
          _
        $region28: #{tpu_custom_call.1} parent=11 // pred_fallthru
          _
        // Predicated region
        $region29: #{tpu_custom_call.1} parent=11 // pred_check
          %p224 = pneg %p150
        $region30: #{tpu_custom_call.1} parent=11 // pred_check_branch
          %226 = sbr.rel (%p224) target = $region32
        $region31: #{tpu_custom_call.1} parent=11 // pred_region
          _
        $region32: #{tpu_custom_call.1} parent=11 // pred_fallthru
          _
        // Predicated region
        $region33: #{tpu_custom_call.1} parent=11 // pred_check
          %p227 = pneg %p171
        $region34: #{tpu_custom_call.1} parent=11 // pred_check_branch
          %229 = sbr.rel (%p227) target = $region36
        $region35: #{tpu_custom_call.1} parent=11 // pred_region
          _
        $region36: #{tpu_custom_call.1} parent=11 // pred_fallthru
          _
      $region12: #{tpu_custom_call.1} parent=5 // pred_fallthru
        _
      %p230 = scmp.lt.s32.totalorder %s19, 2
      // Predicated region
      $region37: #{tpu_custom_call.1} parent=5 // pred_check
        %p231 = pneg %p230
      $region38: #{tpu_custom_call.1} parent=5 // pred_check_branch
        %233 = sbr.rel (%p231) target = $region40
      $region39: #{tpu_custom_call.1} parent=5 // pred_region
        // Predicated region
        $region41: #{tpu_custom_call.1} parent=39 // pred_check
          %p234 = pneg %p39
        $region42: #{tpu_custom_call.1} parent=39 // pred_check_branch
          %236 = sbr.rel (%p234) target = $region44
        $region43: #{tpu_custom_call.1} parent=39 // pred_region
          %s237 = sand.u32 %s29, 1
          %s238 = scalar_lea.sflag [#allocation3], %s237
          %s239 = sand.u32 %s29, 1
          %s240 = smul.addr %s239, 8
          %s241 = scalar_lea.vmem [#allocation2], %s240
          %s243 = ssub.s32 128, 128
          %244 = vsyncadd %s238, %s243
          %s245 = smul.addr %s19, 128
          %s246 = scalar_lea.hbm %s0, %s245
          %s248 = sshll.u32 %s241, 4
          %s249 = int_to_ptr.vmem [resolvable:$true] %s248
          %251 = dma.hbm_to_vmem [thread:$0]  %s246, 128, %s249, %s238
        $region44: #{tpu_custom_call.1} parent=39 // pred_fallthru
          _
      $region40: #{tpu_custom_call.1} parent=5 // pred_fallthru
        _
      %p252 = scmp.le.s32.totalorder 1, %s19
      %p253 = scmp.lt.s32.totalorder %s19, 3
      %p254 = pnand %p252, %p253
      %p255 = pneg %p254
      // Predicated region
      $region45: #{tpu_custom_call.1} parent=5 // pred_check
        _
      $region46: #{tpu_custom_call.1} parent=5 // pred_check_branch
        %257 = sbr.rel (%p254) target = $region48
      $region47: #{tpu_custom_call.1} parent=5 // pred_region
        %s258 = ssub.s32 %s19, 1
        %s259 = sand.u32 %s32, 1
        %s260 = scalar_lea.sflag [#allocation3], %s259
        %s261 = sand.u32 %s32, 1
        %s262 = smul.addr %s261, 8
        %s263 = scalar_lea.vmem [#allocation2], %s262
        // Predicated region
        $region49: #{tpu_custom_call.1} parent=47 // pred_check
          %p264 = pneg %p45
        $region50: #{tpu_custom_call.1} parent=47 // pred_check_branch
          %266 = sbr.rel (%p264) target = $region52
        $region51: #{tpu_custom_call.1} parent=47 // pred_region
          %267 = dma.done %s260, 128
        $region52: #{tpu_custom_call.1} parent=47 // pred_fallthru
          _
        %s268 = sand.u32 %s32, 1
        %s269 = scalar_lea.sflag [#allocation3], %s268
        %s270 = sand.u32 %s32, 1
        %s271 = smul.addr %s270, 8
        %s272 = scalar_lea.vmem [#allocation2], %s271
        %p273 = pneg %p45
        %p274 = pneg %p42
        %p275 = pneg %p66
        %p276 = pneg %p63
        %p277 = pneg %p87
        %p278 = pneg %p84
        %p279 = pneg %p108
        %p280 = pneg %p105
        %p281 = pneg %p129
        %p282 = pneg %p126
        %p283 = pneg %p150
        %p284 = pneg %p147
        %p285 = pneg %p171
        %p286 = pneg %p168
        %p287 = pneg %p197
        %p288 = pneg %p194
        %s289 = sand.u32 %s184, 1
        %s290 = scalar_lea.sflag [#allocation4], %s289
        %s291 = sand.u32 %s184, 1
        %s292 = smul.addr %s291, 8
        %s293 = scalar_lea.vmem [#allocation5], %s292
        %v294 = vld [vmem:[%s1] sm:$0xff]
        %s295 = scalar_lea.vmem %s1, 8
        %v296 = vld [vmem:[%s295] sm:$0xff]
        %s297 = scalar_lea.vmem %s1, 16
        %v298 = vld [vmem:[%s297] sm:$0xff]
        %v299 = vld [vmem:[%s3] sm:$0xf]
        %v300 = vld [vmem:[%s5] sm:$0xff]
        %v301 = vld [vmem:[%s2] sm:$0xff]
        %303 = vset.pattern.permute.xlu0 0
        %304 = vperm.xlu0 %303, %v301
        %v305 = vpop.permute.xlu0 %304
        %v307 = vld [vmem:[%s263] sm:$0xff]
        %309 = vrot.lane.b32.xlu0 %v307, 1
        %v310 = vpop.permute.xlu0 %309
        %vm312 = vcmask 7168
        %v313 = vsel %vm312, 0.0, %v310
        %314 = vrot.lane.b32.xlu0 %v307, 127
        %v315 = vpop.permute.xlu0 %314
        %vm317 = vcmask 1039360
        %v318 = vsel %vm317, %v315, 0.0
        %vm319 = vcmask 64512
        %v321 = vsel %vm319, %v294, 0
        %323 = vmatprep.subr.mxu0 0.0
        %324 = vmatpush1.msra.mxu0 0.0
        %325 = vmatprep.subr.mxu0 0.0
        %326 = vmatpush1.msra.mxu0 0.0
        %327 = vmatprep.subr.mxu0 0.0
        %328 = vmatpush1.msra.mxu0 0.0
        %329 = vmatprep.subr.mxu0 0.0
        %330 = vmatpush1.msra.mxu0 0.0
        %331 = vmatprep.subr.mxu0 0.0
        %332 = vmatpush1.msra.mxu0 0.0
        %333 = vmatprep.subr.mxu0 0.0
        %334 = vmatpush1.msra.mxu0 0.0
        %335 = vmatprep.subr.mxu0 0.0
        %336 = vmatpush1.msra.mxu0 0.0
        %337 = vmatprep.subr.mxu0 0.0
        %338 = vmatpush1.msra.mxu0 0.0
        %339 = vmatprep.subr.mxu0 0.0
        %340 = vmatpush1.msra.mxu0 0.0
        %341 = vmatprep.subr.mxu0 0.0
        %342 = vmatpush1.msra.mxu0 0.0
        %343 = vmatprep.subr.mxu0 0.0
        %344 = vmatpush1.msra.mxu0 0.0
        %345 = vmatprep.subr.mxu0 0.0
        %346 = vmatpush1.msra.mxu0 0.0
        %347 = vmatprep.subr.mxu0 0.0
        %348 = vmatpush1.msra.mxu0 0.0
        %349 = vmatprep.subr.mxu0 0.0
        %350 = vmatpush1.msra.mxu0 0.0
        %351 = vmatprep.subr.mxu0 0.0
        %352 = vmatpush1.msra.mxu0 0.0
        %353 = vmatprep.subr.mxu0 0.0
        %354 = vmatpush1.msra.mxu0 %v313
        %355 = vmatprep.subr.mxu0 0.0
        %356 = vmatpush2.msra.mxu0 0.0
        %357 = vmatprep.subr.mxu0 0.0
        %358 = vmatpush2.msra.mxu0 0.0
        %359 = vmatprep.subr.mxu0 0.0
        %360 = vmatpush2.msra.mxu0 0.0
        %361 = vmatprep.subr.mxu0 0.0
        %362 = vmatpush2.msra.mxu0 0.0
        %363 = vmatprep.subr.mxu0 0.0
        %364 = vmatpush2.msra.mxu0 0.0
        %365 = vmatprep.subr.mxu0 0.0
        %366 = vmatpush2.msra.mxu0 0.0
        %367 = vmatprep.subr.mxu0 0.0
        %368 = vmatpush2.msra.mxu0 0.0
        %369 = vmatprep.subr.mxu0 0.0
        %370 = vmatpush2.msra.mxu0 0.0
        %371 = vmatprep.subr.mxu0 0.0
        %372 = vmatpush2.msra.mxu0 0.0
        %373 = vmatprep.subr.mxu0 0.0
        %374 = vmatpush2.msra.mxu0 0.0
        %375 = vmatprep.subr.mxu0 0.0
        %376 = vmatpush2.msra.mxu0 0.0
        %377 = vmatprep.subr.mxu0 0.0
        %378 = vmatpush2.msra.mxu0 0.0
        %379 = vmatprep.subr.mxu0 0.0
        %380 = vmatpush2.msra.mxu0 0.0
        %381 = vmatprep.subr.mxu0 0.0
        %382 = vmatpush2.msra.mxu0 0.0
        %383 = vmatprep.subr.mxu0 0.0
        %384 = vmatpush2.msra.mxu0 0.0
        %385 = vmatprep.subr.mxu0 0.0
        %386 = vmatpush2.msra.mxu0 0.0
        %387 = vmatprep.mubr.f32.mxu0 0.0
        %388 = vmatmul.mubr.f32.gmra.mxu0 %v321
        %v389 = vpop.f32.mrf.mxu0
        %v390 = vadd.f32 0.0, %v389
        %v391 = vpop.f32.mrf.mxu0
        %392 = vdwg.mxu0
        %v394 = vsel %vm319, %v296, 0
        %396 = vmatprep.subr.mxu0 0.0
        %397 = vmatpush1.msra.mxu0 0.0
        %398 = vmatprep.subr.mxu0 0.0
        %399 = vmatpush1.msra.mxu0 0.0
        %400 = vmatprep.subr.mxu0 0.0
        %401 = vmatpush1.msra.mxu0 0.0
        %402 = vmatprep.subr.mxu0 0.0
        %403 = vmatpush1.msra.mxu0 0.0
        %404 = vmatprep.subr.mxu0 0.0
        %405 = vmatpush1.msra.mxu0 0.0
        %406 = vmatprep.subr.mxu0 0.0
        %407 = vmatpush1.msra.mxu0 0.0
        %408 = vmatprep.subr.mxu0 0.0
        %409 = vmatpush1.msra.mxu0 0.0
        %410 = vmatprep.subr.mxu0 0.0
        %411 = vmatpush1.msra.mxu0 0.0
        %412 = vmatprep.subr.mxu0 0.0
        %413 = vmatpush1.msra.mxu0 0.0
        %414 = vmatprep.subr.mxu0 0.0
        %415 = vmatpush1.msra.mxu0 0.0
        %416 = vmatprep.subr.mxu0 0.0
        %417 = vmatpush1.msra.mxu0 0.0
        %418 = vmatprep.subr.mxu0 0.0
        %419 = vmatpush1.msra.mxu0 0.0
        %420 = vmatprep.subr.mxu0 0.0
        %421 = vmatpush1.msra.mxu0 0.0
        %422 = vmatprep.subr.mxu0 0.0
        %423 = vmatpush1.msra.mxu0 0.0
        %424 = vmatprep.subr.mxu0 0.0
        %425 = vmatpush1.msra.mxu0 0.0
        %426 = vmatprep.subr.mxu0 0.0
        %427 = vmatpush1.msra.mxu0 %v307
        %428 = vmatprep.subr.mxu0 0.0
        %429 = vmatpush2.msra.mxu0 0.0
        %430 = vmatprep.subr.mxu0 0.0
        %431 = vmatpush2.msra.mxu0 0.0
        %432 = vmatprep.subr.mxu0 0.0
        %433 = vmatpush2.msra.mxu0 0.0
        %434 = vmatprep.subr.mxu0 0.0
        %435 = vmatpush2.msra.mxu0 0.0
        %436 = vmatprep.subr.mxu0 0.0
        %437 = vmatpush2.msra.mxu0 0.0
        %438 = vmatprep.subr.mxu0 0.0
        %439 = vmatpush2.msra.mxu0 0.0
        %440 = vmatprep.subr.mxu0 0.0
        %441 = vmatpush2.msra.mxu0 0.0
        %442 = vmatprep.subr.mxu0 0.0
        %443 = vmatpush2.msra.mxu0 0.0
        %444 = vmatprep.subr.mxu0 0.0
        %445 = vmatpush2.msra.mxu0 0.0
        %446 = vmatprep.subr.mxu0 0.0
        %447 = vmatpush2.msra.mxu0 0.0
        %448 = vmatprep.subr.mxu0 0.0
        %449 = vmatpush2.msra.mxu0 0.0
        %450 = vmatprep.subr.mxu0 0.0
        %451 = vmatpush2.msra.mxu0 0.0
        %452 = vmatprep.subr.mxu0 0.0
        %453 = vmatpush2.msra.mxu0 0.0
        %454 = vmatprep.subr.mxu0 0.0
        %455 = vmatpush2.msra.mxu0 0.0
        %456 = vmatprep.subr.mxu0 0.0
        %457 = vmatpush2.msra.mxu0 0.0
        %458 = vmatprep.subr.mxu0 0.0
        %459 = vmatpush2.msra.mxu0 0.0
        %460 = vmatprep.mubr.f32.mxu0 0.0
        %461 = vmatmul.mubr.f32.gmra.mxu0 %v394
        %v462 = vpop.f32.mrf.mxu0
        %v463 = vadd.f32 %v390, %v462
        %v464 = vpop.f32.mrf.mxu0
        %465 = vdwg.mxu0
        %v467 = vsel %vm319, %v298, 0
        %469 = vmatprep.subr.mxu0 0.0
        %470 = vmatpush1.msra.mxu0 0.0
        %471 = vmatprep.subr.mxu0 0.0
        %472 = vmatpush1.msra.mxu0 0.0
        %473 = vmatprep.subr.mxu0 0.0
        %474 = vmatpush1.msra.mxu0 0.0
        %475 = vmatprep.subr.mxu0 0.0
        %476 = vmatpush1.msra.mxu0 0.0
        %477 = vmatprep.subr.mxu0 0.0
        %478 = vmatpush1.msra.mxu0 0.0
        %479 = vmatprep.subr.mxu0 0.0
        %480 = vmatpush1.msra.mxu0 0.0
        %481 = vmatprep.subr.mxu0 0.0
        %482 = vmatpush1.msra.mxu0 0.0
        %483 = vmatprep.subr.mxu0 0.0
        %484 = vmatpush1.msra.mxu0 0.0
        %485 = vmatprep.subr.mxu0 0.0
        %486 = vmatpush1.msra.mxu0 0.0
        %487 = vmatprep.subr.mxu0 0.0
        %488 = vmatpush1.msra.mxu0 0.0
        %489 = vmatprep.subr.mxu0 0.0
        %490 = vmatpush1.msra.mxu0 0.0
        %491 = vmatprep.subr.mxu0 0.0
        %492 = vmatpush1.msra.mxu0 0.0
        %493 = vmatprep.subr.mxu0 0.0
        %494 = vmatpush1.msra.mxu0 0.0
        %495 = vmatprep.subr.mxu0 0.0
        %496 = vmatpush1.msra.mxu0 0.0
        %497 = vmatprep.subr.mxu0 0.0
        %498 = vmatpush1.msra.mxu0 0.0
        %499 = vmatprep.subr.mxu0 0.0
        %500 = vmatpush1.msra.mxu0 %v318
        %501 = vmatprep.subr.mxu0 0.0
        %502 = vmatpush2.msra.mxu0 0.0
        %503 = vmatprep.subr.mxu0 0.0
        %504 = vmatpush2.msra.mxu0 0.0
        %505 = vmatprep.subr.mxu0 0.0
        %506 = vmatpush2.msra.mxu0 0.0
        %507 = vmatprep.subr.mxu0 0.0
        %508 = vmatpush2.msra.mxu0 0.0
        %509 = vmatprep.subr.mxu0 0.0
        %510 = vmatpush2.msra.mxu0 0.0
        %511 = vmatprep.subr.mxu0 0.0
        %512 = vmatpush2.msra.mxu0 0.0
        %513 = vmatprep.subr.mxu0 0.0
        %514 = vmatpush2.msra.mxu0 0.0
        %515 = vmatprep.subr.mxu0 0.0
        %516 = vmatpush2.msra.mxu0 0.0
        %517 = vmatprep.subr.mxu0 0.0
        %518 = vmatpush2.msra.mxu0 0.0
        %519 = vmatprep.subr.mxu0 0.0
        %520 = vmatpush2.msra.mxu0 0.0
        %521 = vmatprep.subr.mxu0 0.0
        %522 = vmatpush2.msra.mxu0 0.0
        %523 = vmatprep.subr.mxu0 0.0
        %524 = vmatpush2.msra.mxu0 0.0
        %525 = vmatprep.subr.mxu0 0.0
        %526 = vmatpush2.msra.mxu0 0.0
        %527 = vmatprep.subr.mxu0 0.0
        %528 = vmatpush2.msra.mxu0 0.0
        %529 = vmatprep.subr.mxu0 0.0
        %530 = vmatpush2.msra.mxu0 0.0
        %531 = vmatprep.subr.mxu0 0.0
        %532 = vmatpush2.msra.mxu0 0.0
        %533 = vmatprep.mubr.f32.mxu0 0.0
        %534 = vmatmul.mubr.f32.gmra.mxu0 %v467
        %v535 = vpop.f32.mrf.mxu0
        %v536 = vadd.f32 0.0, %v535
        %v537 = vpop.f32.mrf.mxu0
        %538 = vdwg.mxu0
        %v539 = vadd.f32 %v463, %v536
        %v540 = vadd.f32 %v539, %v305
        %v541 = vmax.f32 %v540, 0.0
        %542 = vadd.xlane.f32.xlu0 %v541
        %v543 = vpop.xlane.xlu0 %542
        %v544 = vmul.f32 %v543, 0.0078125
        %v545 = vld [vmem:[%s4] sm:$0xf]
        %v547 = vsel %vm319, %v299, 0
        %549 = vmatprep.subr.mxu0 0.0
        %550 = vmatpush1.msra.mxu0 0.0
        %551 = vmatprep.subr.mxu0 0.0
        %552 = vmatpush1.msra.mxu0 0.0
        %553 = vmatprep.subr.mxu0 0.0
        %554 = vmatpush1.msra.mxu0 0.0
        %555 = vmatprep.subr.mxu0 0.0
        %556 = vmatpush1.msra.mxu0 0.0
        %557 = vmatprep.subr.mxu0 0.0
        %558 = vmatpush1.msra.mxu0 0.0
        %559 = vmatprep.subr.mxu0 0.0
        %560 = vmatpush1.msra.mxu0 0.0
        %561 = vmatprep.subr.mxu0 0.0
        %562 = vmatpush1.msra.mxu0 0.0
        %563 = vmatprep.subr.mxu0 0.0
        %564 = vmatpush1.msra.mxu0 0.0
        %565 = vmatprep.subr.mxu0 0.0
        %566 = vmatpush1.msra.mxu0 0.0
        %567 = vmatprep.subr.mxu0 0.0
        %568 = vmatpush1.msra.mxu0 0.0
        %569 = vmatprep.subr.mxu0 0.0
        %570 = vmatpush1.msra.mxu0 0.0
        %571 = vmatprep.subr.mxu0 0.0
        %572 = vmatpush1.msra.mxu0 0.0
        %573 = vmatprep.subr.mxu0 0.0
        %574 = vmatpush1.msra.mxu0 0.0
        %575 = vmatprep.subr.mxu0 0.0
        %576 = vmatpush1.msra.mxu0 0.0
        %577 = vmatprep.subr.mxu0 0.0
        %578 = vmatpush1.msra.mxu0 0.0
        %579 = vmatprep.subr.mxu0 0.0
        %580 = vmatpush1.msra.mxu0 %v544
        %581 = vmatprep.subr.mxu0 0.0
        %582 = vmatpush2.msra.mxu0 0.0
        %583 = vmatprep.subr.mxu0 0.0
        %584 = vmatpush2.msra.mxu0 0.0
        %585 = vmatprep.subr.mxu0 0.0
        %586 = vmatpush2.msra.mxu0 0.0
        %587 = vmatprep.subr.mxu0 0.0
        %588 = vmatpush2.msra.mxu0 0.0
        %589 = vmatprep.subr.mxu0 0.0
        %590 = vmatpush2.msra.mxu0 0.0
        %591 = vmatprep.subr.mxu0 0.0
        %592 = vmatpush2.msra.mxu0 0.0
        %593 = vmatprep.subr.mxu0 0.0
        %594 = vmatpush2.msra.mxu0 0.0
        %595 = vmatprep.subr.mxu0 0.0
        %596 = vmatpush2.msra.mxu0 0.0
        %597 = vmatprep.subr.mxu0 0.0
        %598 = vmatpush2.msra.mxu0 0.0
        %599 = vmatprep.subr.mxu0 0.0
        %600 = vmatpush2.msra.mxu0 0.0
        %601 = vmatprep.subr.mxu0 0.0
        %602 = vmatpush2.msra.mxu0 0.0
        %603 = vmatprep.subr.mxu0 0.0
        %604 = vmatpush2.msra.mxu0 0.0
        %605 = vmatprep.subr.mxu0 0.0
        %606 = vmatpush2.msra.mxu0 0.0
        %607 = vmatprep.subr.mxu0 0.0
        %608 = vmatpush2.msra.mxu0 0.0
        %609 = vmatprep.subr.mxu0 0.0
        %610 = vmatpush2.msra.mxu0 0.0
        %611 = vmatprep.subr.mxu0 0.0
        %612 = vmatpush2.msra.mxu0 0.0
        %613 = vmatprep.mubr.f32.mxu0 0.0
        %614 = vmatmul.mubr.f32.gmra.mxu0 %v547
        %v615 = vpop.f32.mrf.mxu0
        %v616 = vadd.f32 %v545, %v615
        %v617 = vpop.f32.mrf.mxu0
        %618 = vdwg.mxu0
        %v619 = vmax.f32 %v616, 0.0
        %v620 = vld [vmem:[%s6] sm:$0xff]
        %vm621 = vcmask 31744
        %v623 = vsel %vm621, %v300, 0
        %vm625 = vcmask 1043456
        %v627 = vsel %vm625, %v619, 0
        %629 = vmatprep.subr.mxu0 0.0
        %630 = vmatpush1.msra.mxu0 0.0
        %631 = vmatprep.subr.mxu0 0.0
        %632 = vmatpush1.msra.mxu0 0.0
        %633 = vmatprep.subr.mxu0 0.0
        %634 = vmatpush1.msra.mxu0 0.0
        %635 = vmatprep.subr.mxu0 0.0
        %636 = vmatpush1.msra.mxu0 0.0
        %637 = vmatprep.subr.mxu0 0.0
        %638 = vmatpush1.msra.mxu0 0.0
        %639 = vmatprep.subr.mxu0 0.0
        %640 = vmatpush1.msra.mxu0 0.0
        %641 = vmatprep.subr.mxu0 0.0
        %642 = vmatpush1.msra.mxu0 0.0
        %643 = vmatprep.subr.mxu0 0.0
        %644 = vmatpush1.msra.mxu0 0.0
        %645 = vmatprep.subr.mxu0 0.0
        %646 = vmatpush1.msra.mxu0 0.0
        %647 = vmatprep.subr.mxu0 0.0
        %648 = vmatpush1.msra.mxu0 0.0
        %649 = vmatprep.subr.mxu0 0.0
        %650 = vmatpush1.msra.mxu0 0.0
        %651 = vmatprep.subr.mxu0 0.0
        %652 = vmatpush1.msra.mxu0 0.0
        %653 = vmatprep.subr.mxu0 0.0
        %654 = vmatpush1.msra.mxu0 0.0
        %655 = vmatprep.subr.mxu0 0.0
        %656 = vmatpush1.msra.mxu0 0.0
        %657 = vmatprep.subr.mxu0 0.0
        %658 = vmatpush1.msra.mxu0 0.0
        %659 = vmatprep.subr.mxu0 0.0
        %660 = vmatpush1.msra.mxu0 %v627
        %661 = vmatprep.subr.mxu0 0.0
        %662 = vmatpush2.msra.mxu0 0.0
        %663 = vmatprep.subr.mxu0 0.0
        %664 = vmatpush2.msra.mxu0 0.0
        %665 = vmatprep.subr.mxu0 0.0
        %666 = vmatpush2.msra.mxu0 0.0
        %667 = vmatprep.subr.mxu0 0.0
        %668 = vmatpush2.msra.mxu0 0.0
        %669 = vmatprep.subr.mxu0 0.0
        %670 = vmatpush2.msra.mxu0 0.0
        %671 = vmatprep.subr.mxu0 0.0
        %672 = vmatpush2.msra.mxu0 0.0
        %673 = vmatprep.subr.mxu0 0.0
        %674 = vmatpush2.msra.mxu0 0.0
        %675 = vmatprep.subr.mxu0 0.0
        %676 = vmatpush2.msra.mxu0 0.0
        %677 = vmatprep.subr.mxu0 0.0
        %678 = vmatpush2.msra.mxu0 0.0
        %679 = vmatprep.subr.mxu0 0.0
        %680 = vmatpush2.msra.mxu0 0.0
        %681 = vmatprep.subr.mxu0 0.0
        %682 = vmatpush2.msra.mxu0 0.0
        %683 = vmatprep.subr.mxu0 0.0
        %684 = vmatpush2.msra.mxu0 0.0
        %685 = vmatprep.subr.mxu0 0.0
        %686 = vmatpush2.msra.mxu0 0.0
        %687 = vmatprep.subr.mxu0 0.0
        %688 = vmatpush2.msra.mxu0 0.0
        %689 = vmatprep.subr.mxu0 0.0
        %690 = vmatpush2.msra.mxu0 0.0
        %691 = vmatprep.subr.mxu0 0.0
        %692 = vmatpush2.msra.mxu0 0.0
        %693 = vmatprep.mubr.f32.mxu0 0.0
        %694 = vmatmul.mubr.f32.gmra.mxu0 %v623
        %v695 = vpop.f32.mrf.mxu0
        %v696 = vadd.f32 %v620, %v695
        %v697 = vpop.f32.mrf.mxu0
        %698 = vdwg.mxu0
        %v699 = vxor.u32 %v696, 2147483648
        %v700 = vmul.f32 %v699, 1.442695
        %v701 = vpow.pop %v700
        %v702 = vadd.f32 %v701, 1.0
        %v703 = vrcp.pop %v702
        %v704 = vmul.f32 1.0, %v703
        %v705 = vadd.f32 %v704, 1.0
        %707 = vset.pattern.permute.xlu0 0
        %708 = vperm.xlu0 %707, %v705
        %v709 = vpop.permute.xlu0 %708
        %v711 = vmul.f32 %v307, %v709
        %712 = vst [vmem:[%s293] sm:$0xff] %v711
        %s713 = sand.u32 %s184, 1
        %s714 = scalar_lea.sflag [#allocation4], %s713
        %s715 = sand.u32 %s184, 1
        %s716 = smul.addr %s715, 8
        %s717 = scalar_lea.vmem [#allocation5], %s716
        // Predicated region
        $region53: #{tpu_custom_call.1} parent=47 // pred_check
          %p718 = pneg %p194
        $region54: #{tpu_custom_call.1} parent=47 // pred_check_branch
          %720 = sbr.rel (%p718) target = $region56
        $region55: #{tpu_custom_call.1} parent=47 // pred_region
          %s722 = ssub.s32 128, 128
          %723 = vsyncadd %s714, %s722
          %s724 = smul.addr %s24, 128
          %s725 = scalar_lea.hbm %s7, %s724
          %s727 = sshll.u32 %s717, 4
          %s728 = int_to_ptr.vmem [resolvable:$true] %s727
          %730 = dma.vmem_to_hbm [thread:$0]  %s728, 128, %s725, %s714
        $region56: #{tpu_custom_call.1} parent=47 // pred_fallthru
          _
      $region48: #{tpu_custom_call.1} parent=5 // pred_fallthru
        _
      %p731 = scmp.le.s32.totalorder 2, %s19
      // Predicated region
      $region57: #{tpu_custom_call.1} parent=5 // pred_check
        %p732 = pneg %p731
      $region58: #{tpu_custom_call.1} parent=5 // pred_check_branch
        %734 = sbr.rel (%p732) target = $region60
      $region59: #{tpu_custom_call.1} parent=5 // pred_region
        %s735 = ssub.s32 %s19, 2
        // Predicated region
        $region61: #{tpu_custom_call.1} parent=59 // pred_check
          %p736 = pneg %p200
        $region62: #{tpu_custom_call.1} parent=59 // pred_check_branch
          %738 = sbr.rel (%p736) target = $region64
        $region63: #{tpu_custom_call.1} parent=59 // pred_region
          %s739 = sand.u32 %s185, 1
          %s740 = scalar_lea.sflag [#allocation4], %s739
          %s741 = sand.u32 %s185, 1
          %s742 = smul.addr %s741, 8
          %s743 = scalar_lea.vmem [#allocation5], %s742
          %744 = dma.done %s740, 128
        $region64: #{tpu_custom_call.1} parent=59 // pred_fallthru
          _
      $region60: #{tpu_custom_call.1} parent=5 // pred_fallthru
        _
    $region6: #{tpu_custom_call.1} parent=1 // loop_footer
      %s23 = sadd.s32 1, %s19
    $region7: #{tpu_custom_call.1} parent=1 // loop_footer_branch
      %18 = sbr.rel target = $region3
    $region8: #{tpu_custom_call.1} parent=1 // loop_exit
      _
    %745 = vsyncpa [#allocation3], 1
    %s746 = scalar_lea.sflag [#allocation3], 1
    %747 = vsyncpa %s746, 1
    %748 = vsyncpa [#allocation4], 1
    %s749 = scalar_lea.sflag [#allocation4], 1
    %750 = vsyncpa %s749, 1

</llo_original>
